<compile_context>
chip_gen: v6e
topology: v6e:2x2x1
jax: 0.10.0
libtpu: 0.0.40
codegen_flags: <defaults>
</compile_context>

<pallas_src>
import functools

import jax
import jax.numpy as jnp
from jax import lax
from jax.experimental import pallas as pl
from jax.experimental.pallas import tpu as pltpu


def _make_kernel(*, T, t_tile, sub, n_sub, ragged, unroll):
    """Grid = (batch_tiles, time_tiles).  Accumulate the time-sum of hidden states
    in an f32 VMEM scratch; on the last time tile run the classifier matmul and
    store lane-dense logits."""

    def kernel(hs_ref, bias_ref, wc_ref, out_ref, acc_ref):
        t = pl.program_id(1)
        n_t = pl.num_programs(1)

        @pl.when(t == 0)
        def _():
            acc_ref[...] = jnp.zeros_like(acc_ref)

        # ---- chunked time-sum: register-resident carry, one VMEM += per tile ----
        def body(i, carry):
            start = pl.multiple_of(i * sub, sub)
            chunk = hs_ref[:, pl.ds(start, sub), :].astype(jnp.float32)
            if ragged:  # static: only emitted when T % t_tile != 0
                g = (t * t_tile + start
                     + lax.broadcasted_iota(jnp.int32, (1, sub, 1), 1))
                chunk = jnp.where(g < T, chunk, 0.0)
            return carry + jnp.sum(chunk, axis=1)

        zero = jnp.zeros(acc_ref.shape, jnp.float32)
        partial = lax.fori_loop(0, n_sub, body, zero, unroll=unroll)
        acc_ref[...] += partial

        # ---- epilogue: classifier, once per batch tile --------------------------
        # 1/T is folded into wc in the wrapper, so acc @ wc == mean(hs) @ Wc_h.
        # Concat + prosody MLP are folded into bias_ref (= pros_emb @ Wc_p + bc).
        # TODO(synk): dropout(0.1) is identity at inference; training-mode RNG mask
        # is not implemented.
        @pl.when(t == n_t - 1)
        def _():
            logits = (jnp.dot(acc_ref[...], wc_ref[...],
                              preferred_element_type=jnp.float32)
                      + bias_ref[...])
            out_ref[...] = logits

    return kernel


def wav2vec2_prosodic_classifier(hidden_states, prosodic_features, params,
                                 *, t_tile=None):
    """hidden_states: [B, T, H] wav2vec2 last hidden state (any float dtype —
    stream bf16 from the backbone for half the HBM traffic); prosodic: [B, P]."""
    B, T, H = hidden_states.shape
    L = params["bc"].shape[-1]
    L_pad = 128 * pl.cdiv(L, 128)
    f32 = jnp.float32

    # ---- tiny prosody MLP + classifier split, folded in the wrapper ------------
    # [wav | pros] @ Wc + bc == wav @ Wc_h + (pros_emb @ Wc_p + bc)
    p = prosodic_features.astype(f32)
    h1 = jnp.maximum(p @ params["w1"].astype(f32) + params["b1"].astype(f32), 0.0)
    h2 = jnp.maximum(h1 @ params["w2"].astype(f32) + params["b2"].astype(f32), 0.0)
    bias_rows = h2 @ params["wc_p"].astype(f32) + params["bc"].astype(f32)  # (B, L)
    wc_h = params["wc_h"].astype(f32) / jnp.float32(T)                       # fold 1/T
    if L_pad > L:  # lane-dense output columns -> unmasked vst
        bias_rows = jnp.pad(bias_rows, ((0, 0), (0, L_pad - L)))
        wc_h = jnp.pad(wc_h, ((0, 0), (0, L_pad - L)))

    # ---- batch tiling: prefer >=2 sublane-aligned batch tiles (v7x dual-TC) ----
    # TODO(synk): for B == 8 only one batch tile exists; splitting the time axis
    # across cores would need two partial accumulators combined at the end.
    b_tile = 8 if (B % 8 == 0 and B >= 16) else B
    itemsize = jnp.dtype(hidden_states.dtype).itemsize

    # ---- VMEM-capacity-aware time tile (double-buffered hs is the big consumer) -
    fixed_bytes = (2 * H * L_pad * 4            # wc (double-buffered)
                   + 2 * b_tile * L_pad * 4     # bias
                   + 2 * b_tile * L_pad * 4     # out
                   + b_tile * H * 4)            # f32 accumulator scratch
    try:
        vmem_cap = int(getattr(pltpu.get_tpu_info(), "vmem_capacity_bytes",
                               64 << 20))
    except Exception:
        vmem_cap = 64 << 20                      # conservative (v7x) fallback
    if t_tile is None:
        budget = int(0.55 * vmem_cap) - fixed_bytes - (2 << 20)
        per_t = 2 * b_tile * H * itemsize        # 2 hs buffers per time step
        t_tile = max(8, min(1024, (budget // max(per_t, 1)) // 8 * 8))
    t_tile = int(min(int(t_tile), 8 * pl.cdiv(T, 8)))
    t_tile = max(8, (t_tile // 8) * 8)

    sub = 16 if t_tile % 16 == 0 else 8
    n_sub = t_tile // sub
    ragged = (T % t_tile) != 0
    unroll = min(4, n_sub)

    grid = (B // b_tile, pl.cdiv(T, t_tile))

    hs_block_bytes = b_tile * t_tile * H * itemsize
    vmem_limit = int(min(vmem_cap,
                         max(16 << 20, fixed_bytes + 2 * hs_block_bytes + (4 << 20))))

    flops = 2 * B * T * H + 2 * B * H * L_pad
    bytes_accessed = int(B * T * H * itemsize + H * L_pad * 4 + 2 * B * L_pad * 4)

    kernel = _make_kernel(T=T, t_tile=t_tile, sub=sub, n_sub=n_sub,
                          ragged=ragged, unroll=unroll)

    out = pl.pallas_call(
        kernel,
        out_shape=jax.ShapeDtypeStruct((B, L_pad), jnp.float32),
        grid_spec=pltpu.PrefetchScalarGridSpec(
            num_scalar_prefetch=0,
            grid=grid,
            in_specs=[
                pl.BlockSpec((b_tile, t_tile, H), lambda b, t: (b, t, 0)),
                pl.BlockSpec((b_tile, L_pad), lambda b, t: (b, 0)),
                pl.BlockSpec((H, L_pad), lambda b, t: (0, 0)),
            ],
            out_specs=pl.BlockSpec((b_tile, L_pad), lambda b, t: (b, 0)),
            scratch_shapes=[pltpu.VMEM((b_tile, H), jnp.float32)],
        ),
        compiler_params=pltpu.CompilerParams(
            dimension_semantics=("parallel", "arbitrary"),
            vmem_limit_bytes=vmem_limit,
        ),
        cost_estimate=pl.CostEstimate(flops=flops, transcendentals=0,
                                      bytes_accessed=bytes_accessed),
    )(hidden_states, bias_rows, wc_h)
    return out[:, :L]


def init_params(key, hidden_size, prosodic_dim, num_labels):
    """Deterministic synthetic parameters matching the module's __init__ shapes,
    stored transposed to (in, out) so everything computes x @ W + b."""
    ks = jax.random.split(key, 5)
    scale = 0.1
    w1 = scale * jax.random.normal(ks[0], (prosodic_dim, 32), jnp.float32)
    b1 = scale * jax.random.normal(ks[1], (1, 32), jnp.float32)
    w2 = scale * jax.random.normal(ks[2], (32, 16), jnp.float32)
    b2 = scale * jax.random.normal(ks[3], (1, 16), jnp.float32)
    kc1, kc2, kc3 = jax.random.split(ks[4], 3)
    wc_h = scale * jax.random.normal(kc1, (hidden_size, num_labels), jnp.float32)
    wc_p = scale * jax.random.normal(kc2, (16, num_labels), jnp.float32)
    bc = scale * jax.random.normal(kc3, (1, num_labels), jnp.float32)
    return dict(w1=w1, b1=b1, w2=w2, b2=b2, wc_h=wc_h, wc_p=wc_p, bc=bc)


def reference_forward(hidden_states, prosodic_features, params):
    """Pure-JAX reference mirroring the PyTorch forward (eval mode), in f32."""
    wav_emb = jnp.mean(hidden_states.astype(jnp.float32), axis=1)
    h = jnp.maximum(prosodic_features @ params["w1"] + params["b1"], 0.0)
    h = jnp.maximum(h @ params["w2"] + params["b2"], 0.0)
    combined = jnp.concatenate([wav_emb, h], axis=-1)
    combined_w = jnp.concatenate([params["wc_h"], params["wc_p"]], axis=0)
    return combined @ combined_w + params["bc"]


if __name__ == "__main__":
    # Small shapes consistent with the forward:
    #   B = batch, T = time frames, H = wav2vec2 hidden_size,
    #   P = prosodic_dim (num_extracted_features), L = num_labels
    B, T, H, P, L = 2, 8, 32, 8, 4

    key = jax.random.PRNGKey(0)
    k_hs, k_pf, k_params = jax.random.split(key, 3)

    hidden_states = jax.random.normal(k_hs, (B, T, H), jnp.float32)
    prosodic_features = jax.random.normal(k_pf, (B, P), jnp.float32)
    params = init_params(k_params, H, P, L)

    logits = wav2vec2_prosodic_classifier(hidden_states, prosodic_features, params)
    logits = jax.block_until_ready(logits)
    ref = reference_forward(hidden_states, prosodic_features, params)
    assert logits.shape == (B, L)
    assert jnp.allclose(logits, ref, atol=1e-3, rtol=1e-3), "mismatch vs reference"

    # Second check: ragged time axis (T not a multiple of t_tile) exercises the
    # in-kernel tail masking that replaced the wrapper-side pad.
    T2 = 37
    hs2 = jax.random.normal(jax.random.PRNGKey(1), (B, T2, H), jnp.float32)
    logits2 = jax.block_until_ready(
        wav2vec2_prosodic_classifier(hs2, prosodic_features, params, t_tile=16))
    ref2 = reference_forward(hs2, prosodic_features, params)
    assert jnp.allclose(logits2, ref2, atol=1e-3, rtol=1e-3), "ragged-T mismatch"

    print("KERNEL_OK")
</pallas_src>

<mosaic_0001>
module attributes {stable_mosaic.version = 11 : i64} {
  func.func @kernel(%arg0: i32, %arg1: i32, %arg2: memref<2x8x32xf32, #tpu.memory_space<vmem>>, %arg3: memref<2x128xf32, #tpu.memory_space<vmem>>, %arg4: memref<32x128xf32, #tpu.memory_space<vmem>>, %arg5: memref<2x128xf32, #tpu.memory_space<vmem>>, %arg6: memref<2x32xf32, #tpu.memory_space<vmem>>) attributes {dimension_semantics = [#tpu.dimension_semantics<parallel>, #tpu.dimension_semantics<arbitrary>], iteration_bounds = array<i64: 1, 1>, scalar_prefetch = 0 : i64, scratch_operands = 1 : i64, tpu.core_type = #tpu.core_type<tc>, window_params = [{transform_indices = @transform_0, window_bounds = array<i64: 2, 8, 32>}, {transform_indices = @transform_1, window_bounds = array<i64: 2, 128>}, {pipeline_mode = #tpu.pipeline_mode<synchronous>, transform_indices = @transform_2, window_bounds = array<i64: 32, 128>}, {transform_indices = @transform_3, window_bounds = array<i64: 2, 128>}]} {
    %c0_i32 = arith.constant 0 : i32
    %0 = arith.cmpi eq, %arg1, %c0_i32 : i32
    %1 = arith.extui %0 : i1 to i32
    %c0_i32_0 = arith.constant 0 : i32
    %2 = arith.cmpi ne, %1, %c0_i32_0 : i32
    scf.if %2 {
      %cst_10 = arith.constant 0.000000e+00 : f32
      %16 = vector.broadcast %cst_10 : f32 to vector<2x32xf32>
      %c0_11 = arith.constant 0 : index
      %c0_12 = arith.constant 0 : index
      %17 = vector.load %arg6[%c0_11, %c0_12] : memref<2x32xf32, #tpu.memory_space<vmem>>, vector<2x32xf32>
      tpu.vector_store %arg6[%c0_11, %c0_12], %16 {strides = array<i32>} : memref<2x32xf32, #tpu.memory_space<vmem>>, vector<2x32xf32>,
    } else {
    }
    %cst = arith.constant 0.000000e+00 : f32
    %3 = vector.broadcast %cst : f32 to vector<2x32xf32>
    %c0_i32_1 = arith.constant 0 : i32
    %c8_i32 = arith.constant 8 : i32
    %4 = arith.muli %c0_i32_1, %c8_i32 : i32
    %5 = tpu.assume_multiple %4, 8 : i32
    %c0 = arith.constant 0 : index
    %6 = arith.index_cast %5 : i32 to index
    %c0_2 = arith.constant 0 : index
    %7 = vector.load %arg2[%c0, %6, %c0_2] : memref<2x8x32xf32, #tpu.memory_space<vmem>>, vector<2x8x32xf32>
    %cst_3 = arith.constant dense<0.000000e+00> : vector<2x32xf32>
    %8 = vector.multi_reduction <add>, %7, %cst_3 [1] : vector<2x8x32xf32> to vector<2x32xf32>
    %9 = arith.addf %3, %8 : vector<2x32xf32>
    %c1_i32 = arith.constant 1 : i32
    %c0_4 = arith.constant 0 : index
    %c0_5 = arith.constant 0 : index
    %10 = vector.load %arg6[%c0_4, %c0_5] : memref<2x32xf32, #tpu.memory_space<vmem>>, vector<2x32xf32>
    %11 = arith.addf %10, %9 : vector<2x32xf32>
    %c0_6 = arith.constant 0 : index
    %c0_7 = arith.constant 0 : index
    %12 = vector.load %arg6[%c0_6, %c0_7] : memref<2x32xf32, #tpu.memory_space<vmem>>, vector<2x32xf32>
    tpu.vector_store %arg6[%c0_6, %c0_7], %11 {strides = array<i32>} : memref<2x32xf32, #tpu.memory_space<vmem>>, vector<2x32xf32>,
    %c0_i32_8 = arith.constant 0 : i32
    %13 = arith.cmpi eq, %arg1, %c0_i32_8 : i32
    %14 = arith.extui %13 : i1 to i32
    %c0_i32_9 = arith.constant 0 : i32
    %15 = arith.cmpi ne, %14, %c0_i32_9 : i32
    scf.if %15 {
      %c0_10 = arith.constant 0 : index
      %c0_11 = arith.constant 0 : index
      %16 = vector.load %arg6[%c0_10, %c0_11] : memref<2x32xf32, #tpu.memory_space<vmem>>, vector<2x32xf32>
      %c0_12 = arith.constant 0 : index
      %c0_13 = arith.constant 0 : index
      %17 = vector.load %arg4[%c0_12, %c0_13] : memref<32x128xf32, #tpu.memory_space<vmem>>, vector<32x128xf32>
      %cst_14 = arith.constant dense<0.000000e+00> : vector<2x128xf32>
      %18 = tpu.matmul %16, %17, %cst_14 {dimension_numbers = #tpu.dot_dimension_numbers<[1], [0], [0], [1], [0, 0, 1, 1], [], []>} : vector<2x32xf32>, vector<32x128xf32>, vector<2x128xf32> -> vector<2x128xf32>
      %c0_15 = arith.constant 0 : index
      %c0_16 = arith.constant 0 : index
      %19 = vector.load %arg3[%c0_15, %c0_16] : memref<2x128xf32, #tpu.memory_space<vmem>>, vector<2x128xf32>
      %20 = arith.addf %18, %19 : vector<2x128xf32>
      %c0_17 = arith.constant 0 : index
      %c0_18 = arith.constant 0 : index
      %21 = vector.load %arg5[%c0_17, %c0_18] : memref<2x128xf32, #tpu.memory_space<vmem>>, vector<2x128xf32>
      tpu.vector_store %arg5[%c0_17, %c0_18], %20 {strides = array<i32>} : memref<2x128xf32, #tpu.memory_space<vmem>>, vector<2x128xf32>,
    } else {
    }
    return
  }
  func.func @transform_0(%arg0: i32, %arg1: i32) -> (i32, i32, i32) {
    %c0_i32 = arith.constant 0 : i32
    %c0_i32_0 = arith.constant 0 : i32
    return %arg0, %arg1, %c0_i32 : i32, i32, i32
  }
  func.func @transform_1(%arg0: i32, %arg1: i32) -> (i32, i32) {
    %c0_i32 = arith.constant 0 : i32
    %c0_i32_0 = arith.constant 0 : i32
    return %arg0, %c0_i32 : i32, i32
  }
  func.func @transform_2(%arg0: i32, %arg1: i32) -> (i32, i32) {
    %c0_i32 = arith.constant 0 : i32
    %c0_i32_0 = arith.constant 0 : i32
    %c0_i32_1 = arith.constant 0 : i32
    return %c0_i32, %c0_i32_0 : i32, i32
  }
  func.func @transform_3(%arg0: i32, %arg1: i32) -> (i32, i32) {
    %c0_i32 = arith.constant 0 : i32
    %c0_i32_0 = arith.constant 0 : i32
    return %arg0, %c0_i32 : i32, i32
  }
}

</mosaic_0001>

<llo_original>
// kernel: tpu_custom_call.1
$region0: #{tpu_custom_call.1}
  #allocation0 [shape = 'u32[]', space=smem, size = 0x4, offset = 0x4, fixed_abs, tag = 'smem constant byte address 0x4 - core index']
  #allocation1 [shape = 'u32[144,128]{1,0:T(1,128)}', space=vmem, size = 0x12000, scoped, tag = 'internal scratch']
  #allocation2 [shape = 'f32[2,32]{1,0:T(2,128)}', space=vmem, size = 0x400, scoped, tag = 'scratch operand']
  %s0 = inlined_call_operand.hbm [shape: f32[2,8,32], index: 0, kind: input, shape index: {}]
  %s1 = inlined_call_operand.hbm [shape: f32[2,128], index: 1, kind: input, shape index: {}]
  %s2 = inlined_call_operand.hbm [shape: f32[32,128], index: 2, kind: input, shape index: {}]
  %s3 = inlined_call_operand.hbm [shape: f32[2,128], index: 3, kind: output, shape index: {}]
  %s4 = sld [smem:[#allocation0]]
  $region42: #{tpu_custom_call.1} parent=0
    _
  %s6 = ssub.s32 1, %s4
  %s7 = scalar_select 0, %s6, %s4
  $region1: #{tpu_custom_call.1} parent=0
    #allocation3 [shape = 'u8[8192]{0}', space=vmem, size = 0x2000, scoped, tag = 'input window, operand 0, single buffered']
    #allocation4 [shape = 's32[1]{0}', space=sflag, size = 0x4, scoped, tag = 'scoped memory for tpu_custom_call.1']
    #allocation5 [shape = 's32[1]{0}', space=sflag, size = 0x4, scoped, tag = 'scoped memory for tpu_custom_call.1']
    #allocation6 [shape = 'u8[1024]{0}', space=vmem, size = 0x400, scoped, tag = 'input window, operand 1, single buffered']
    #allocation7 [shape = 's32[1]{0}', space=sflag, size = 0x4, scoped, tag = 'scoped memory for tpu_custom_call.1']
    #allocation8 [shape = 'u8[16384]{0}', space=vmem, size = 0x4000, scoped, tag = 'input window, operand 2, single buffered']
    #allocation9 [shape = 'u8[1024]{0}', space=vmem, size = 0x400, scoped, tag = 'output window, operand 0, single buffered']
    %8 = vsyncpa [#allocation4], 0
    %9 = vsyncpa [#allocation7], 0
    %10 = vsyncpa [#allocation5], 0
    // Predicated region
    $region2: #{tpu_custom_call.1} parent=1 // pred_check
      _
    $region3: #{tpu_custom_call.1} parent=1 // pred_check_branch
      %12 = sbr.rel (0) target = $region5
    $region4: #{tpu_custom_call.1} parent=1 // pred_region
      %s14 = ssub.s32 256, 256
      %15 = vsyncadd [#allocation4], %s14
      %s16 = sshll.u32 [#allocation3], 4
      %s17 = int_to_ptr.vmem [resolvable:$true] %s16
      %22 = dma.hbm_to_vmem [thread:$0]  %s0, 256, %s17, [#allocation4], 128, 128, 8
    $region5: #{tpu_custom_call.1} parent=1 // pred_fallthru
      _
    // Predicated region
    $region6: #{tpu_custom_call.1} parent=1 // pred_check
      _
    $region7: #{tpu_custom_call.1} parent=1 // pred_check_branch
      %24 = sbr.rel (0) target = $region9
    $region8: #{tpu_custom_call.1} parent=1 // pred_region
      %s26 = ssub.s32 32, 32
      %27 = vsyncadd [#allocation7], %s26
      %s29 = sshll.u32 [#allocation6], 4
      %s30 = int_to_ptr.vmem [resolvable:$true] %s29
      %32 = dma.hbm_to_vmem [thread:$0]  %s1, 32, %s30, [#allocation7]
    $region9: #{tpu_custom_call.1} parent=1 // pred_fallthru
      _
    // Predicated region
    $region10: #{tpu_custom_call.1} parent=1 // pred_check
      _
    $region11: #{tpu_custom_call.1} parent=1 // pred_check_branch
      %34 = sbr.rel (0) target = $region13
    $region12: #{tpu_custom_call.1} parent=1 // pred_region
      %s36 = ssub.s32 512, 512
      %37 = vsyncadd [#allocation7], %s36
      %s38 = sshll.u32 [#allocation8], 4
      %s39 = int_to_ptr.vmem [resolvable:$true] %s38
      %44 = dma.hbm_to_vmem [thread:$0]  %s2, 512, %s39, [#allocation7], 128, 128, 8
    $region13: #{tpu_custom_call.1} parent=1 // pred_fallthru
      _
    // Predicated region
    $region14: #{tpu_custom_call.1} parent=1 // pred_check
      _
    $region15: #{tpu_custom_call.1} parent=1 // pred_check_branch
      %46 = sbr.rel (0) target = $region17
    $region16: #{tpu_custom_call.1} parent=1 // pred_region
      %47 = dma.done [#allocation4], 256
    $region17: #{tpu_custom_call.1} parent=1 // pred_fallthru
      _
    // Predicated region
    $region18: #{tpu_custom_call.1} parent=1 // pred_check
      _
    $region19: #{tpu_custom_call.1} parent=1 // pred_check_branch
      %49 = sbr.rel (0) target = $region21
    $region20: #{tpu_custom_call.1} parent=1 // pred_region
      %50 = dma.done [#allocation7], 32
    $region21: #{tpu_custom_call.1} parent=1 // pred_fallthru
      _
    // Predicated region
    $region22: #{tpu_custom_call.1} parent=1 // pred_check
      _
    $region23: #{tpu_custom_call.1} parent=1 // pred_check_branch
      %52 = sbr.rel (0) target = $region25
    $region24: #{tpu_custom_call.1} parent=1 // pred_region
      %53 = dma.done [#allocation7], 512
    $region25: #{tpu_custom_call.1} parent=1 // pred_fallthru
      _
    %p54 = scmp.eq.s32.totalorder 0, 0
    // Predicated region
    $region26: #{tpu_custom_call.1} parent=1 // pred_check
      %p55 = pneg %p54
    $region27: #{tpu_custom_call.1} parent=1 // pred_check_branch
      %57 = sbr.rel (%p55) target = $region29
    $region28: #{tpu_custom_call.1} parent=1 // pred_region
      %vm58 = vcmask 254976
      %59 = vst.msk [vmem:[#allocation2] sm:$0x3] %vm58, 0.0
    $region29: #{tpu_custom_call.1} parent=1 // pred_fallthru
      _
    %v60 = vld [vmem:[#allocation3] sm:$0xff]
    %v61 = vld [vmem:[#allocation3 + $0x8] sm:$0xff]
    %vm62 = vcmask 261120
    %v63 = vsel %vm62, %v60, 0.0
    %v64 = vrot.slane %v63, 4
    %v65 = vadd.f32 %v63, %v64
    %v66 = vrot.slane %v65, 2
    %v67 = vadd.f32 %v65, %v66
    %v68 = vrot.slane %v67, 1
    %v69 = vadd.f32 %v67, %v68
    %v70 = vsel %vm62, %v61, 0.0
    %v71 = vrot.slane %v70, 4
    %v72 = vadd.f32 %v70, %v71
    %v73 = vrot.slane %v72, 2
    %v74 = vadd.f32 %v72, %v73
    %v75 = vrot.slane %v74, 1
    %v76 = vadd.f32 %v74, %v75
    %v77 = vadd.f32 %v69, 0.0
    %v78 = vadd.f32 %v76, 0.0
    %v79 = vld [vmem:[#allocation2] sm:$0x3]
    %vm82 = vcmask 1041409
    %v83 = vsel %vm82, %v78, %v77
    %v85 = vadd.f32 %v79, %v83
    %vm86 = vcmask 254976
    %87 = vst.msk [vmem:[#allocation2] sm:$0x3] %vm86, %v85
    // Predicated region
    $region30: #{tpu_custom_call.1} parent=1 // pred_check
      %p88 = pneg %p54
    $region31: #{tpu_custom_call.1} parent=1 // pred_check_branch
      %90 = sbr.rel (%p88) target = $region33
    $region32: #{tpu_custom_call.1} parent=1 // pred_region
      %v91 = vld [vmem:[#allocation2] sm:$0x3]
      %v92 = vld [vmem:[#allocation8] sm:$0xff]
      %v93 = vld [vmem:[#allocation8 + $0x8] sm:$0xff]
      %v94 = vld [vmem:[#allocation8 + $0x10] sm:$0xff]
      %v95 = vld [vmem:[#allocation8 + $0x18] sm:$0xff]
      %v96 = vld [vmem:[#allocation6] sm:$0x3]
      %v98 = vsel %vm62, %v91, 0
      %100 = vmatprep.subr.mxu0 0.0
      %101 = vmatpush1.msra.mxu0 0.0
      %102 = vmatprep.subr.mxu0 0.0
      %103 = vmatpush1.msra.mxu0 0.0
      %104 = vmatprep.subr.mxu0 0.0
      %105 = vmatpush1.msra.mxu0 0.0
      %106 = vmatprep.subr.mxu0 0.0
      %107 = vmatpush1.msra.mxu0 0.0
      %108 = vmatprep.subr.mxu0 0.0
      %109 = vmatpush1.msra.mxu0 0.0
      %110 = vmatprep.subr.mxu0 0.0
      %111 = vmatpush1.msra.mxu0 0.0
      %112 = vmatprep.subr.mxu0 0.0
      %113 = vmatpush1.msra.mxu0 0.0
      %114 = vmatprep.subr.mxu0 0.0
      %115 = vmatpush1.msra.mxu0 0.0
      %116 = vmatprep.subr.mxu0 0.0
      %117 = vmatpush1.msra.mxu0 0.0
      %118 = vmatprep.subr.mxu0 0.0
      %119 = vmatpush1.msra.mxu0 0.0
      %120 = vmatprep.subr.mxu0 0.0
      %121 = vmatpush1.msra.mxu0 0.0
      %122 = vmatprep.subr.mxu0 0.0
      %123 = vmatpush1.msra.mxu0 0.0
      %124 = vmatprep.subr.mxu0 0.0
      %125 = vmatpush1.msra.mxu0 %v95
      %126 = vmatprep.subr.mxu0 0.0
      %127 = vmatpush1.msra.mxu0 %v94
      %128 = vmatprep.subr.mxu0 0.0
      %129 = vmatpush1.msra.mxu0 %v93
      %130 = vmatprep.subr.mxu0 0.0
      %131 = vmatpush1.msra.mxu0 %v92
      %132 = vmatprep.subr.mxu0 0.0
      %133 = vmatpush2.msra.mxu0 0.0
      %134 = vmatprep.subr.mxu0 0.0
      %135 = vmatpush2.msra.mxu0 0.0
      %136 = vmatprep.subr.mxu0 0.0
      %137 = vmatpush2.msra.mxu0 0.0
      %138 = vmatprep.subr.mxu0 0.0
      %139 = vmatpush2.msra.mxu0 0.0
      %140 = vmatprep.subr.mxu0 0.0
      %141 = vmatpush2.msra.mxu0 0.0
      %142 = vmatprep.subr.mxu0 0.0
      %143 = vmatpush2.msra.mxu0 0.0
      %144 = vmatprep.subr.mxu0 0.0
      %145 = vmatpush2.msra.mxu0 0.0
      %146 = vmatprep.subr.mxu0 0.0
      %147 = vmatpush2.msra.mxu0 0.0
      %148 = vmatprep.subr.mxu0 0.0
      %149 = vmatpush2.msra.mxu0 0.0
      %150 = vmatprep.subr.mxu0 0.0
      %151 = vmatpush2.msra.mxu0 0.0
      %152 = vmatprep.subr.mxu0 0.0
      %153 = vmatpush2.msra.mxu0 0.0
      %154 = vmatprep.subr.mxu0 0.0
      %155 = vmatpush2.msra.mxu0 0.0
      %156 = vmatprep.subr.mxu0 0.0
      %157 = vmatpush2.msra.mxu0 0.0
      %158 = vmatprep.subr.mxu0 0.0
      %159 = vmatpush2.msra.mxu0 0.0
      %160 = vmatprep.subr.mxu0 0.0
      %161 = vmatpush2.msra.mxu0 0.0
      %162 = vmatprep.subr.mxu0 0.0
      %163 = vmatpush2.msra.mxu0 0.0
      %164 = vmatprep.mubr.f32.mxu0 0.0
      %165 = vmatmul.mubr.f32.gmra.mxu0 %v98
      %v166 = vpop.f32.mrf.mxu0
      %v167 = vadd.f32 %v96, %v166
      %v168 = vpop.f32.mrf.mxu0
      %169 = vdwg.mxu0
      %170 = vst [vmem:[#allocation9] sm:$0x3] %v167
    $region33: #{tpu_custom_call.1} parent=1 // pred_fallthru
      _
    // Predicated region
    $region34: #{tpu_custom_call.1} parent=1 // pred_check
      _
    $region35: #{tpu_custom_call.1} parent=1 // pred_check_branch
      %172 = sbr.rel (0) target = $region37
    $region36: #{tpu_custom_call.1} parent=1 // pred_region
      %s174 = ssub.s32 32, 32
      %175 = vsyncadd [#allocation5], %s174
      %s177 = sshll.u32 [#allocation9], 4
      %s178 = int_to_ptr.vmem [resolvable:$true] %s177
      %180 = dma.vmem_to_hbm [thread:$0]  %s178, 32, %s3, [#allocation5]
    $region37: #{tpu_custom_call.1} parent=1 // pred_fallthru
      _
    // Predicated region
    $region38: #{tpu_custom_call.1} parent=1 // pred_check
      _
    $region39: #{tpu_custom_call.1} parent=1 // pred_check_branch
      %182 = sbr.rel (0) target = $region41
    $region40: #{tpu_custom_call.1} parent=1 // pred_region
      %183 = dma.done [#allocation5], 32
    $region41: #{tpu_custom_call.1} parent=1 // pred_fallthru
      _
    %184 = vsyncpa [#allocation4], 1
    %185 = vsyncpa [#allocation7], 1
    %186 = vsyncpa [#allocation5], 1

</llo_original>
